<compile_context>
chip_gen: v7x
topology: tpu7x:2x2x1
jax: 0.10.0
libtpu: 0.0.40
codegen_flags: <defaults>
</compile_context>

<pallas_src>
import jax
import jax.numpy as jnp
from jax import lax
from jax.experimental import pallas as pl
from jax.experimental.pallas import tpu as pltpu

_LANES = 128


def _dice_sums_kernel(i_ref, t_ref, w_ref, inter_ref, denom_ref):
    """Accumulate lane-dense partial sums for one (rows, TV) voxel tile."""
    k = pl.program_id(1)  # reduction (voxel-tile) axis

    @pl.when(k == 0)
    def _init():
        inter_ref[...] = jnp.zeros_like(inter_ref)
        denom_ref[...] = jnp.zeros_like(denom_ref)

    rows, tv = i_ref.shape
    n_chunks = tv // _LANES

    def chunk_body(c, carry):
        inter_p, denom_p = carry
        off = pl.multiple_of(c * _LANES, _LANES)
        i = i_ref[:, pl.ds(off, _LANES)].astype(jnp.float32)
        t = t_ref[:, pl.ds(off, _LANES)].astype(jnp.float32)
        w = w_ref[:, pl.ds(off, _LANES)].astype(jnp.float32)
        iw = i * w                                 # keep live temporaries low
        inter_p = inter_p + iw * t                 # sum(i * t * w)
        denom_p = denom_p + iw + t * w             # sum((i + t) * w)
        return inter_p, denom_p

    zero = jnp.zeros((rows, _LANES), jnp.float32)
    inter_p, denom_p = lax.fori_loop(
        0, n_chunks, chunk_body, (zero, zero), unroll=min(8, n_chunks))

    inter_ref[...] += inter_p
    denom_ref[...] += denom_p


def dice_loss_sample_voxel_weighted(
        inp, target, sample_weight, voxel_weight, *,
        tv_max=8192, n_split=2, vmem_budget_bytes=8 * 1024 * 1024):
    """inp/target/voxel_weight: (B, C, *spatial); sample_weight: (B, C)."""
    smooth = 1.0
    B, C = inp.shape[0], inp.shape[1]
    R = B * C

    iflat = inp.reshape(R, -1)
    tflat = target.reshape(R, -1)
    wflat = voxel_weight.reshape(R, -1)
    V = iflat.shape[-1]

    # Rows (B*C) padded to a multiple of 8 sublanes.
    Rp = ((R + 7) // 8) * 8

    # Voxel tile: big (amortizes per-step overhead), lane-aligned, and within a
    # conservative VMEM budget (3 inputs x 2 pipeline buffers x Rp rows x 4B).
    bytes_per_lane = 3 * 2 * Rp * 4
    tv_cap = max(_LANES, (vmem_budget_bytes // bytes_per_lane) // _LANES * _LANES)
    tv_max = max(_LANES, (tv_max // _LANES) * _LANES)

    total_chunks = pl.cdiv(V, _LANES)
    chunks_per_split = pl.cdiv(total_chunks, n_split)
    tile_chunks = min(min(tv_max, tv_cap) // _LANES, chunks_per_split)
    tiles_per_split = pl.cdiv(chunks_per_split, tile_chunks)
    TV = tile_chunks * _LANES
    Vp = n_split * tiles_per_split * TV

    # Pad rows with zeros (contribute nothing) and voxels with zero weight.
    if Rp != R or Vp != V:
        pad = [(0, Rp - R), (0, Vp - V)]
        iflat = jnp.pad(iflat, pad)
        tflat = jnp.pad(tflat, pad)
        wflat = jnp.pad(wflat, pad)

    def in_spec():
        return pl.BlockSpec((Rp, TV),
                            lambda p, k: (0, p * tiles_per_split + k))

    def out_spec():
        # Leading (split) dim squeezed; block resident across the k axis.
        return pl.BlockSpec((None, Rp, _LANES), lambda p, k: (p, 0, 0))

    grid_spec = pltpu.PrefetchScalarGridSpec(
        num_scalar_prefetch=0,
        grid=(n_split, tiles_per_split),
        in_specs=[in_spec(), in_spec(), in_spec()],
        out_specs=(out_spec(), out_spec()),
    )

    inter_part, denom_part = pl.pallas_call(
        _dice_sums_kernel,
        out_shape=(
            jax.ShapeDtypeStruct((n_split, Rp, _LANES), jnp.float32),
            jax.ShapeDtypeStruct((n_split, Rp, _LANES), jnp.float32),
        ),
        grid_spec=grid_spec,
        compiler_params=pltpu.CompilerParams(
            dimension_semantics=("parallel", "arbitrary")),
    )(iflat, tflat, wflat)

    # Tiny epilogue in plain JAX: combine split/lane partials, dice ratio,
    # sample weighting, batch mean.
    inter = jnp.sum(inter_part, axis=(0, 2))[:R].reshape(B, C)
    denom = jnp.sum(denom_part, axis=(0, 2))[:R].reshape(B, C)
    dice = (2.0 * inter + smooth) / (denom + smooth)
    weighted = dice * sample_weight.astype(jnp.float32)
    total = jnp.sum(weighted, axis=1)
    return 1.0 - jnp.mean(total)


def _reference(inp, target, sample_weight, voxel_weight):
    smooth = 1.0
    B, C = inp.shape[0], inp.shape[1]
    iflat = inp.reshape(B, C, -1).astype(jnp.float32)
    tflat = target.reshape(B, C, -1).astype(jnp.float32)
    wflat = voxel_weight.reshape(B, C, -1).astype(jnp.float32)
    inter = jnp.sum(iflat * tflat * wflat, axis=2)
    denom = jnp.sum((iflat + tflat) * wflat, axis=2)
    dice = (2.0 * inter + smooth) / (denom + smooth)
    weighted = dice * sample_weight.astype(jnp.float32)
    total = jnp.sum(weighted, axis=1)
    return 1.0 - jnp.mean(total)


if __name__ == "__main__":
    key = jax.random.PRNGKey(0)
    k1, k2, k3, k4, k5, k6, k7, k8 = jax.random.split(key, 8)

    # Primary shape: B=2, C=4, 16x16 spatial.
    B, C, H, W = 2, 4, 16, 16
    inp = jax.nn.sigmoid(jax.random.normal(k1, (B, C, H, W), dtype=jnp.float32))
    target = (jax.random.uniform(k2, (B, C, H, W)) > 0.5).astype(jnp.float32)
    voxel_weight = jax.random.uniform(k3, (B, C, H, W), dtype=jnp.float32)
    sample_weight = jax.random.uniform(k4, (B, C), dtype=jnp.float32)

    loss = dice_loss_sample_voxel_weighted(inp, target, sample_weight, voxel_weight)
    loss = jax.block_until_ready(loss)
    ref = _reference(inp, target, sample_weight, voxel_weight)
    assert jnp.allclose(loss, ref, rtol=1e-5, atol=1e-5), (loss, ref)

    # Secondary shape exercising row + voxel padding (B*C not a multiple of 8,
    # H*W not a multiple of 128).
    B2, C2, H2, W2 = 2, 3, 9, 13
    inp2 = jax.nn.sigmoid(jax.random.normal(k5, (B2, C2, H2, W2), dtype=jnp.float32))
    target2 = (jax.random.uniform(k6, (B2, C2, H2, W2)) > 0.5).astype(jnp.float32)
    voxel_weight2 = jax.random.uniform(k7, (B2, C2, H2, W2), dtype=jnp.float32)
    sample_weight2 = jax.random.uniform(k8, (B2, C2), dtype=jnp.float32)

    loss2 = dice_loss_sample_voxel_weighted(
        inp2, target2, sample_weight2, voxel_weight2)
    loss2 = jax.block_until_ready(loss2)
    ref2 = _reference(inp2, target2, sample_weight2, voxel_weight2)
    assert jnp.allclose(loss2, ref2, rtol=1e-5, atol=1e-5), (loss2, ref2)

    print("KERNEL_OK")
</pallas_src>

<mosaic_0001>
module attributes {stable_mosaic.version = 11 : i64} {
  func.func @_dice_sums_kernel(%arg0: i32, %arg1: i32, %arg2: memref<8x128xf32, #tpu.memory_space<vmem>>, %arg3: memref<8x128xf32, #tpu.memory_space<vmem>>, %arg4: memref<8x128xf32, #tpu.memory_space<vmem>>, %arg5: memref<1x8x128xf32, #tpu.memory_space<vmem>>, %arg6: memref<1x8x128xf32, #tpu.memory_space<vmem>>) attributes {dimension_semantics = [#tpu.dimension_semantics<parallel>, #tpu.dimension_semantics<arbitrary>], iteration_bounds = array<i64: 2, 1>, scalar_prefetch = 0 : i64, scratch_operands = 0 : i64, tpu.core_type = #tpu.core_type<tc>, window_params = [{transform_indices = @transform_0, window_bounds = array<i64: 8, 128>}, {transform_indices = @transform_1, window_bounds = array<i64: 8, 128>}, {transform_indices = @transform_2, window_bounds = array<i64: 8, 128>}, {transform_indices = @transform_3, window_bounds = array<i64: 1, 8, 128>}, {transform_indices = @transform_4, window_bounds = array<i64: 1, 8, 128>}]} {
    %c0_i32 = arith.constant 0 : i32
    %0 = arith.cmpi eq, %arg1, %c0_i32 : i32
    %1 = arith.extui %0 : i1 to i32
    %c0_i32_0 = arith.constant 0 : i32
    %2 = arith.cmpi ne, %1, %c0_i32_0 : i32
    scf.if %2 {
      %cst_16 = arith.constant 0.000000e+00 : f32
      %30 = vector.broadcast %cst_16 : f32 to vector<8x128xf32>
      %c0_17 = arith.constant 0 : index
      %c0_18 = arith.constant 0 : index
      %c0_19 = arith.constant 0 : index
      %31 = vector.load %arg5[%c0_17, %c0_18, %c0_19] : memref<1x8x128xf32, #tpu.memory_space<vmem>>, vector<1x8x128xf32>
      %32 = vector.shape_cast %31 : vector<1x8x128xf32> to vector<8x128xf32>
      %33 = vector.shape_cast %30 : vector<8x128xf32> to vector<1x8x128xf32>
      tpu.vector_store %arg5[%c0_17, %c0_18, %c0_19], %33 {strides = array<i32>} : memref<1x8x128xf32, #tpu.memory_space<vmem>>, vector<1x8x128xf32>,
      %cst_20 = arith.constant 0.000000e+00 : f32
      %34 = vector.broadcast %cst_20 : f32 to vector<8x128xf32>
      %c0_21 = arith.constant 0 : index
      %c0_22 = arith.constant 0 : index
      %c0_23 = arith.constant 0 : index
      %35 = vector.load %arg6[%c0_21, %c0_22, %c0_23] : memref<1x8x128xf32, #tpu.memory_space<vmem>>, vector<1x8x128xf32>
      %36 = vector.shape_cast %35 : vector<1x8x128xf32> to vector<8x128xf32>
      %37 = vector.shape_cast %34 : vector<8x128xf32> to vector<1x8x128xf32>
      tpu.vector_store %arg6[%c0_21, %c0_22, %c0_23], %37 {strides = array<i32>} : memref<1x8x128xf32, #tpu.memory_space<vmem>>, vector<1x8x128xf32>,
    } else {
    }
    %cst = arith.constant 0.000000e+00 : f32
    %3 = vector.broadcast %cst : f32 to vector<8x128xf32>
    %c0_i32_1 = arith.constant 0 : i32
    %c128_i32 = arith.constant 128 : i32
    %4 = arith.muli %c0_i32_1, %c128_i32 : i32
    %5 = tpu.assume_multiple %4, 128 : i32
    %c0 = arith.constant 0 : index
    %6 = arith.index_cast %5 : i32 to index
    %7 = vector.load %arg2[%c0, %6] : memref<8x128xf32, #tpu.memory_space<vmem>>, vector<8x128xf32>
    %c0_2 = arith.constant 0 : index
    %8 = arith.index_cast %5 : i32 to index
    %9 = vector.load %arg3[%c0_2, %8] : memref<8x128xf32, #tpu.memory_space<vmem>>, vector<8x128xf32>
    %c0_3 = arith.constant 0 : index
    %10 = arith.index_cast %5 : i32 to index
    %11 = vector.load %arg4[%c0_3, %10] : memref<8x128xf32, #tpu.memory_space<vmem>>, vector<8x128xf32>
    %12 = arith.mulf %7, %11 : vector<8x128xf32>
    %13 = arith.mulf %12, %9 : vector<8x128xf32>
    %14 = arith.addf %3, %13 : vector<8x128xf32>
    %15 = arith.addf %3, %12 : vector<8x128xf32>
    %16 = arith.mulf %9, %11 : vector<8x128xf32>
    %17 = arith.addf %15, %16 : vector<8x128xf32>
    %c1_i32 = arith.constant 1 : i32
    %c0_4 = arith.constant 0 : index
    %c0_5 = arith.constant 0 : index
    %c0_6 = arith.constant 0 : index
    %18 = vector.load %arg5[%c0_4, %c0_5, %c0_6] : memref<1x8x128xf32, #tpu.memory_space<vmem>>, vector<1x8x128xf32>
    %19 = vector.shape_cast %18 : vector<1x8x128xf32> to vector<8x128xf32>
    %20 = arith.addf %19, %14 : vector<8x128xf32>
    %c0_7 = arith.constant 0 : index
    %c0_8 = arith.constant 0 : index
    %c0_9 = arith.constant 0 : index
    %21 = vector.load %arg5[%c0_7, %c0_8, %c0_9] : memref<1x8x128xf32, #tpu.memory_space<vmem>>, vector<1x8x128xf32>
    %22 = vector.shape_cast %21 : vector<1x8x128xf32> to vector<8x128xf32>
    %23 = vector.shape_cast %20 : vector<8x128xf32> to vector<1x8x128xf32>
    tpu.vector_store %arg5[%c0_7, %c0_8, %c0_9], %23 {strides = array<i32>} : memref<1x8x128xf32, #tpu.memory_space<vmem>>, vector<1x8x128xf32>,
    %c0_10 = arith.constant 0 : index
    %c0_11 = arith.constant 0 : index
    %c0_12 = arith.constant 0 : index
    %24 = vector.load %arg6[%c0_10, %c0_11, %c0_12] : memref<1x8x128xf32, #tpu.memory_space<vmem>>, vector<1x8x128xf32>
    %25 = vector.shape_cast %24 : vector<1x8x128xf32> to vector<8x128xf32>
    %26 = arith.addf %25, %17 : vector<8x128xf32>
    %c0_13 = arith.constant 0 : index
    %c0_14 = arith.constant 0 : index
    %c0_15 = arith.constant 0 : index
    %27 = vector.load %arg6[%c0_13, %c0_14, %c0_15] : memref<1x8x128xf32, #tpu.memory_space<vmem>>, vector<1x8x128xf32>
    %28 = vector.shape_cast %27 : vector<1x8x128xf32> to vector<8x128xf32>
    %29 = vector.shape_cast %26 : vector<8x128xf32> to vector<1x8x128xf32>
    tpu.vector_store %arg6[%c0_13, %c0_14, %c0_15], %29 {strides = array<i32>} : memref<1x8x128xf32, #tpu.memory_space<vmem>>, vector<1x8x128xf32>,
    return
  }
  func.func @transform_0(%arg0: i32, %arg1: i32) -> (i32, i32) {
    %c1_i32 = arith.constant 1 : i32
    %0 = arith.muli %arg0, %c1_i32 : i32
    %1 = arith.addi %0, %arg1 : i32
    %c0_i32 = arith.constant 0 : i32
    %c0_i32_0 = arith.constant 0 : i32
    return %c0_i32, %1 : i32, i32
  }
  func.func @transform_1(%arg0: i32, %arg1: i32) -> (i32, i32) {
    %c1_i32 = arith.constant 1 : i32
    %0 = arith.muli %arg0, %c1_i32 : i32
    %1 = arith.addi %0, %arg1 : i32
    %c0_i32 = arith.constant 0 : i32
    %c0_i32_0 = arith.constant 0 : i32
    return %c0_i32, %1 : i32, i32
  }
  func.func @transform_2(%arg0: i32, %arg1: i32) -> (i32, i32) {
    %c1_i32 = arith.constant 1 : i32
    %0 = arith.muli %arg0, %c1_i32 : i32
    %1 = arith.addi %0, %arg1 : i32
    %c0_i32 = arith.constant 0 : i32
    %c0_i32_0 = arith.constant 0 : i32
    return %c0_i32, %1 : i32, i32
  }
  func.func @transform_3(%arg0: i32, %arg1: i32) -> (i32, i32, i32) {
    %c0_i32 = arith.constant 0 : i32
    %c0_i32_0 = arith.constant 0 : i32
    %c0_i32_1 = arith.constant 0 : i32
    return %arg0, %c0_i32, %c0_i32_0 : i32, i32, i32
  }
  func.func @transform_4(%arg0: i32, %arg1: i32) -> (i32, i32, i32) {
    %c0_i32 = arith.constant 0 : i32
    %c0_i32_0 = arith.constant 0 : i32
    %c0_i32_1 = arith.constant 0 : i32
    return %arg0, %c0_i32, %c0_i32_0 : i32, i32, i32
  }
}

</mosaic_0001>

<llo_original>
// kernel: tpu_custom_call.1
$region0: #{tpu_custom_call.1}
  #allocation0 [shape = 'u32[]', space=smem, size = 0x4, offset = 0x4, fixed_abs, tag = 'smem constant byte address 0x4 - core index']
  #allocation1 [shape = 'u32[144,128]{1,0:T(1,128)}', space=vmem, size = 0x12000, scoped, tag = 'internal scratch']
  %s0 = inlined_call_operand.hbm [shape: f32[8,256], index: 0, kind: input, shape index: {}]
  %s1 = inlined_call_operand.hbm [shape: f32[8,256], index: 1, kind: input, shape index: {}]
  %s2 = inlined_call_operand.hbm [shape: f32[8,256], index: 2, kind: input, shape index: {}]
  %s3 = inlined_call_operand.hbm [shape: f32[2,8,128], index: 3, kind: output, shape index: {0}]
  %s4 = inlined_call_operand.hbm [shape: f32[2,8,128], index: 4, kind: output, shape index: {1}]
  %5 = xla_tuple %s3, %s4
  %s6 = sld [smem:[#allocation0]]
  $region69: #{tpu_custom_call.1} parent=0
    _
  %s8 = ssub.s32 1, %s6
  %s9 = scalar_select 0, %s8, %s6
  $region1: #{tpu_custom_call.1} parent=0
    #allocation2 [shape = 'u8[8192]{0}', space=vmem, size = 0x2000, scoped, tag = 'input window, operand 0']
    #allocation3 [shape = 's32[2]{0}', space=sflag, size = 0x8, scoped, tag = 'scoped memory for tpu_custom_call.1']
    #allocation4 [shape = 's32[2]{0}', space=sflag, size = 0x8, scoped, tag = 'scoped memory for tpu_custom_call.1']
    #allocation5 [shape = 'u8[8192]{0}', space=vmem, size = 0x2000, scoped, tag = 'input window, operand 1']
    #allocation6 [shape = 's32[2]{0}', space=sflag, size = 0x8, scoped, tag = 'scoped memory for tpu_custom_call.1']
    #allocation7 [shape = 'u8[8192]{0}', space=vmem, size = 0x2000, scoped, tag = 'input window, operand 2']
    #allocation8 [shape = 'u8[8192]{0}', space=vmem, size = 0x2000, scoped, tag = 'output window, operand 0']
    #allocation9 [shape = 'u8[8192]{0}', space=vmem, size = 0x2000, scoped, tag = 'output window, operand 1']
    #allocation10 [shape = 's32[2]{0}', space=sflag, size = 0x8, scoped, tag = 'scoped memory for tpu_custom_call.1']
    %10 = vsyncpa [#allocation3], 0
    %s11 = scalar_lea.sflag [#allocation3], 1
    %12 = vsyncpa %s11, 0
    %13 = vsyncpa [#allocation6], 0
    %s14 = scalar_lea.sflag [#allocation6], 1
    %15 = vsyncpa %s14, 0
    %16 = vsyncpa [#allocation4], 0
    %s17 = scalar_lea.sflag [#allocation4], 1
    %18 = vsyncpa %s17, 0
    %19 = vsyncpa [#allocation10], 0
    %s20 = scalar_lea.sflag [#allocation10], 1
    %21 = vsyncpa %s20, 0
    loop: start=0, step=1, limit=4
    $region2: #{tpu_custom_call.1} parent=1 // loop_pre_header
      _
    $region3: #{tpu_custom_call.1} parent=1 // loop_header
      %s23 = sphi 0, %s27
      %p24 = scmp.ge.s32.totalorder %s23, 4
      %s30 = sphi 0, %s42
      %s31 = sphi 0, %s38
      %s32 = sphi 0, %s30
      %s33 = sphi 0, %s31
      %s34 = sphi 0, %s32
      %s35 = sphi 0, %s33
      %s47 = sphi 0, %s49
      %s50 = sphi 0, %s47
      %s51 = sphi 0, %s50
      %s67 = sphi 0, %s51
      %s75 = sphi 0, %s77
      %s78 = sphi 0, %s75
      %s79 = sphi 0, %s78
      %s95 = sphi 0, %s79
      %s103 = sphi 0, %s105
      %s106 = sphi 0, %s103
      %s107 = sphi 0, %s106
      %s123 = sphi 0, %s107
      %s129 = sphi 0, %s131
      %s132 = sphi 0, %s129
      %s133 = sphi 0, %s132
      %s149 = sphi 0, %s133
      %s155 = sphi 0, %s157
      %s158 = sphi 0, %s155
      %s159 = sphi 0, %s158
      %s175 = sphi 0, %s159
    $region4: #{tpu_custom_call.1} parent=1 // loop_header_branch
      %26 = sbr.rel (%p24) target = $region8
    $region5: #{tpu_custom_call.1} parent=1 // loop_body
      %s28 = ssub.s32 %s23, 1
      %s29 = ssub.s32 %s23, 2
      %s36 = sadd.s32 1, %s31
      %p37 = scmp.ge.s32.totalorder %s36, 1
      %s38 = scalar_select %p37, 0, %s36
      %s39 = sadd.s32 1, %s30
      %s40 = scalar_select %p37, %s39, %s30
      %p41 = scmp.ge.s32.totalorder %s40, 2
      %s42 = scalar_select %p41, 0, %s40
      %s43 = sadd.s32 %s30, %s31
      %s44 = sadd.s32 %s42, %s38
      %s45 = ssub.s32 %s43, %s44
      %p46 = scmp.eq.s32.totalorder %s45, 0
      %s48 = sadd.s32 %s47, 1
      %s49 = scalar_select %p46, %s47, %s48
      %p52 = pneg %p46
      %p53 = scmp.eq.s32.totalorder %s23, 1
      %p54 = por %p52, %p53
      %p55 = scmp.ne.s32.totalorder %s47, %s50
      %p56 = scmp.eq.s32.totalorder %s23, 0
      %p57 = por %p55, %p56
      %p58 = scmp.ne.s32.totalorder %s47, %s50
      %p59 = scmp.eq.s32.totalorder %s28, 1
      %p60 = por %p58, %p59
      %p61 = scmp.ne.s32.totalorder %s50, %s51
      %p62 = scmp.eq.s32.totalorder %s28, 0
      %p63 = por %p61, %p62
      %p64 = scmp.ne.s32.totalorder %s50, %s51
      %p65 = scmp.eq.s32.totalorder %s29, 1
      %p66 = por %p64, %p65
      %p68 = scmp.ne.s32.totalorder %s51, %s67
      %p69 = scmp.eq.s32.totalorder %s29, 0
      %p70 = por %p68, %p69
      %s71 = sadd.s32 %s30, %s31
      %s72 = sadd.s32 %s42, %s38
      %s73 = ssub.s32 %s71, %s72
      %p74 = scmp.eq.s32.totalorder %s73, 0
      %s76 = sadd.s32 %s75, 1
      %s77 = scalar_select %p74, %s75, %s76
      %p80 = pneg %p74
      %p81 = scmp.eq.s32.totalorder %s23, 1
      %p82 = por %p80, %p81
      %p83 = scmp.ne.s32.totalorder %s75, %s78
      %p84 = scmp.eq.s32.totalorder %s23, 0
      %p85 = por %p83, %p84
      %p86 = scmp.ne.s32.totalorder %s75, %s78
      %p87 = scmp.eq.s32.totalorder %s28, 1
      %p88 = por %p86, %p87
      %p89 = scmp.ne.s32.totalorder %s78, %s79
      %p90 = scmp.eq.s32.totalorder %s28, 0
      %p91 = por %p89, %p90
      %p92 = scmp.ne.s32.totalorder %s78, %s79
      %p93 = scmp.eq.s32.totalorder %s29, 1
      %p94 = por %p92, %p93
      %p96 = scmp.ne.s32.totalorder %s79, %s95
      %p97 = scmp.eq.s32.totalorder %s29, 0
      %p98 = por %p96, %p97
      %s99 = sadd.s32 %s30, %s31
      %s100 = sadd.s32 %s42, %s38
      %s101 = ssub.s32 %s99, %s100
      %p102 = scmp.eq.s32.totalorder %s101, 0
      %s104 = sadd.s32 %s103, 1
      %s105 = scalar_select %p102, %s103, %s104
      %p108 = pneg %p102
      %p109 = scmp.eq.s32.totalorder %s23, 1
      %p110 = por %p108, %p109
      %p111 = scmp.ne.s32.totalorder %s103, %s106
      %p112 = scmp.eq.s32.totalorder %s23, 0
      %p113 = por %p111, %p112
      %p114 = scmp.ne.s32.totalorder %s103, %s106
      %p115 = scmp.eq.s32.totalorder %s28, 1
      %p116 = por %p114, %p115
      %p117 = scmp.ne.s32.totalorder %s106, %s107
      %p118 = scmp.eq.s32.totalorder %s28, 0
      %p119 = por %p117, %p118
      %p120 = scmp.ne.s32.totalorder %s106, %s107
      %p121 = scmp.eq.s32.totalorder %s29, 1
      %p122 = por %p120, %p121
      %p124 = scmp.ne.s32.totalorder %s107, %s123
      %p125 = scmp.eq.s32.totalorder %s29, 0
      %p126 = por %p124, %p125
      %s127 = ssub.s32 %s30, %s42
      %p128 = scmp.eq.s32.totalorder %s127, 0
      %s130 = sadd.s32 %s129, 1
      %s131 = scalar_select %p128, %s129, %s130
      %p134 = pneg %p128
      %p135 = scmp.eq.s32.totalorder %s23, 1
      %p136 = por %p134, %p135
      %p137 = scmp.ne.s32.totalorder %s129, %s132
      %p138 = scmp.eq.s32.totalorder %s23, 0
      %p139 = por %p137, %p138
      %p140 = scmp.ne.s32.totalorder %s129, %s132
      %p141 = scmp.eq.s32.totalorder %s28, 1
      %p142 = por %p140, %p141
      %p143 = scmp.ne.s32.totalorder %s132, %s133
      %p144 = scmp.eq.s32.totalorder %s28, 0
      %p145 = por %p143, %p144
      %p146 = scmp.ne.s32.totalorder %s132, %s133
      %p147 = scmp.eq.s32.totalorder %s29, 1
      %p148 = por %p146, %p147
      %p150 = scmp.ne.s32.totalorder %s133, %s149
      %p151 = scmp.eq.s32.totalorder %s29, 0
      %p152 = por %p150, %p151
      %s153 = ssub.s32 %s30, %s42
      %p154 = scmp.eq.s32.totalorder %s153, 0
      %s156 = sadd.s32 %s155, 1
      %s157 = scalar_select %p154, %s155, %s156
      %p160 = pneg %p154
      %p161 = scmp.eq.s32.totalorder %s23, 1
      %p162 = por %p160, %p161
      %p163 = scmp.ne.s32.totalorder %s155, %s158
      %p164 = scmp.eq.s32.totalorder %s23, 0
      %p165 = por %p163, %p164
      %p166 = scmp.ne.s32.totalorder %s155, %s158
      %p167 = scmp.eq.s32.totalorder %s28, 1
      %p168 = por %p166, %p167
      %p169 = scmp.ne.s32.totalorder %s158, %s159
      %p170 = scmp.eq.s32.totalorder %s28, 0
      %p171 = por %p169, %p170
      %p172 = scmp.ne.s32.totalorder %s158, %s159
      %p173 = scmp.eq.s32.totalorder %s29, 1
      %p174 = por %p172, %p173
      %p176 = scmp.ne.s32.totalorder %s159, %s175
      %p177 = scmp.eq.s32.totalorder %s29, 0
      %p178 = por %p176, %p177
      %p179 = scmp.le.s32.totalorder 1, %s23
      %p180 = scmp.lt.s32.totalorder %s23, 3
      %p181 = pnand %p179, %p180
      %p182 = pneg %p181
      // Predicated region
      $region9: #{tpu_custom_call.1} parent=5 // pred_check
        _
      $region10: #{tpu_custom_call.1} parent=5 // pred_check_branch
        %184 = sbr.rel (%p181) target = $region12
      $region11: #{tpu_custom_call.1} parent=5 // pred_region
        %s185 = ssub.s32 %s23, 1
      $region12: #{tpu_custom_call.1} parent=5 // pred_fallthru
        _
      %p186 = scmp.lt.s32.totalorder %s23, 2
      // Predicated region
      $region13: #{tpu_custom_call.1} parent=5 // pred_check
        %p187 = pneg %p186
      $region14: #{tpu_custom_call.1} parent=5 // pred_check_branch
        %189 = sbr.rel (%p187) target = $region16
      $region15: #{tpu_custom_call.1} parent=5 // pred_region
        // Predicated region
        $region17: #{tpu_custom_call.1} parent=15 // pred_check
          %p190 = pneg %p57
        $region18: #{tpu_custom_call.1} parent=15 // pred_check_branch
          %192 = sbr.rel (%p190) target = $region20
        $region19: #{tpu_custom_call.1} parent=15 // pred_region
          %s193 = sand.u32 %s47, 1
          %s194 = scalar_lea.sflag [#allocation3], %s193
          %s195 = sand.u32 %s47, 1
          %s196 = smul.addr %s195, 8
          %s197 = scalar_lea.vmem [#allocation2], %s196
          %s198 = sadd.s32 %s30, %s31
          %s200 = ssub.s32 128, 128
          %201 = vsyncadd %s194, %s200
          %s202 = smul.addr %s198, 128
          %s203 = scalar_lea.hbm %s0, %s202
          %s205 = sshll.u32 %s197, 4
          %s206 = int_to_ptr.vmem [resolvable:$true] %s205
          %208 = dma.hbm_to_vmem [thread:$0]  %s203, 128, %s206, %s194
        $region20: #{tpu_custom_call.1} parent=15 // pred_fallthru
          _
        // Predicated region
        $region21: #{tpu_custom_call.1} parent=15 // pred_check
          %p209 = pneg %p85
        $region22: #{tpu_custom_call.1} parent=15 // pred_check_branch
          %211 = sbr.rel (%p209) target = $region24
        $region23: #{tpu_custom_call.1} parent=15 // pred_region
          %s212 = sand.u32 %s23, 1
          %s213 = scalar_lea.sflag [#allocation6], %s212
          %s214 = sand.u32 %s75, 1
          %s215 = smul.addr %s214, 8
          %s216 = scalar_lea.vmem [#allocation5], %s215
          %s217 = sadd.s32 %s30, %s31
          %s219 = ssub.s32 128, 128
          %220 = vsyncadd %s213, %s219
          %s221 = smul.addr %s217, 128
          %s222 = scalar_lea.hbm %s1, %s221
          %s224 = sshll.u32 %s216, 4
          %s225 = int_to_ptr.vmem [resolvable:$true] %s224
          %227 = dma.hbm_to_vmem [thread:$0]  %s222, 128, %s225, %s213
        $region24: #{tpu_custom_call.1} parent=15 // pred_fallthru
          _
        // Predicated region
        $region25: #{tpu_custom_call.1} parent=15 // pred_check
          %p228 = pneg %p113
        $region26: #{tpu_custom_call.1} parent=15 // pred_check_branch
          %230 = sbr.rel (%p228) target = $region28
        $region27: #{tpu_custom_call.1} parent=15 // pred_region
          %s231 = sand.u32 %s23, 1
          %s232 = scalar_lea.sflag [#allocation6], %s231
          %s233 = sand.u32 %s103, 1
          %s234 = smul.addr %s233, 8
          %s235 = scalar_lea.vmem [#allocation7], %s234
          %s236 = sadd.s32 %s30, %s31
          %s238 = ssub.s32 128, 128
          %239 = vsyncadd %s232, %s238
          %s240 = smul.addr %s236, 128
          %s241 = scalar_lea.hbm %s2, %s240
          %s243 = sshll.u32 %s235, 4
          %s244 = int_to_ptr.vmem [resolvable:$true] %s243
          %246 = dma.hbm_to_vmem [thread:$0]  %s241, 128, %s244, %s232
        $region28: #{tpu_custom_call.1} parent=15 // pred_fallthru
          _
      $region16: #{tpu_custom_call.1} parent=5 // pred_fallthru
        _
      %p247 = scmp.le.s32.totalorder 1, %s23
      %p248 = scmp.lt.s32.totalorder %s23, 3
      %p249 = pnand %p247, %p248
      %p250 = pneg %p249
      // Predicated region
      $region29: #{tpu_custom_call.1} parent=5 // pred_check
        _
      $region30: #{tpu_custom_call.1} parent=5 // pred_check_branch
        %252 = sbr.rel (%p249) target = $region32
      $region31: #{tpu_custom_call.1} parent=5 // pred_region
        %s253 = ssub.s32 %s23, 1
        %s254 = sand.u32 %s50, 1
        %s255 = scalar_lea.sflag [#allocation3], %s254
        %s256 = sand.u32 %s50, 1
        %s257 = smul.addr %s256, 8
        %s258 = scalar_lea.vmem [#allocation2], %s257
        // Predicated region
        $region33: #{tpu_custom_call.1} parent=31 // pred_check
          %p259 = pneg %p63
        $region34: #{tpu_custom_call.1} parent=31 // pred_check_branch
          %261 = sbr.rel (%p259) target = $region36
        $region35: #{tpu_custom_call.1} parent=31 // pred_region
          %262 = dma.done %s255, 128
        $region36: #{tpu_custom_call.1} parent=31 // pred_fallthru
          _
        %s263 = sand.u32 %s28, 1
        %s264 = scalar_lea.sflag [#allocation6], %s263
        %s265 = sand.u32 %s78, 1
        %s266 = smul.addr %s265, 8
        %s267 = scalar_lea.vmem [#allocation5], %s266
        // Predicated region
        $region37: #{tpu_custom_call.1} parent=31 // pred_check
          %p268 = pneg %p91
        $region38: #{tpu_custom_call.1} parent=31 // pred_check_branch
          %270 = sbr.rel (%p268) target = $region40
        $region39: #{tpu_custom_call.1} parent=31 // pred_region
          %271 = dma.done %s264, 128
        $region40: #{tpu_custom_call.1} parent=31 // pred_fallthru
          _
        %s272 = sand.u32 %s28, 1
        %s273 = scalar_lea.sflag [#allocation6], %s272
        %s274 = sand.u32 %s106, 1
        %s275 = smul.addr %s274, 8
        %s276 = scalar_lea.vmem [#allocation7], %s275
        // Predicated region
        $region41: #{tpu_custom_call.1} parent=31 // pred_check
          %p277 = pneg %p119
        $region42: #{tpu_custom_call.1} parent=31 // pred_check_branch
          %279 = sbr.rel (%p277) target = $region44
        $region43: #{tpu_custom_call.1} parent=31 // pred_region
          %280 = dma.done %s273, 128
        $region44: #{tpu_custom_call.1} parent=31 // pred_fallthru
          _
        %s281 = sand.u32 %s50, 1
        %s282 = scalar_lea.sflag [#allocation3], %s281
        %s283 = sand.u32 %s50, 1
        %s284 = smul.addr %s283, 8
        %s285 = scalar_lea.vmem [#allocation2], %s284
        %p286 = pneg %p63
        %p287 = pneg %p60
        %s288 = sand.u32 %s28, 1
        %s289 = scalar_lea.sflag [#allocation6], %s288
        %s290 = sand.u32 %s78, 1
        %s291 = smul.addr %s290, 8
        %s292 = scalar_lea.vmem [#allocation5], %s291
        %p293 = pneg %p91
        %p294 = pneg %p88
        %s295 = sand.u32 %s28, 1
        %s296 = scalar_lea.sflag [#allocation6], %s295
        %s297 = sand.u32 %s106, 1
        %s298 = smul.addr %s297, 8
        %s299 = scalar_lea.vmem [#allocation7], %s298
        %p300 = pneg %p119
        %p301 = pneg %p116
        %p302 = pneg %p145
        %p303 = pneg %p142
        %s304 = sand.u32 %s132, 1
        %s305 = scalar_lea.sflag [#allocation4], %s304
        %s306 = sand.u32 %s132, 1
        %s307 = smul.addr %s306, 8
        %s308 = scalar_lea.vmem [#allocation8], %s307
        %p309 = pneg %p171
        %p310 = pneg %p168
        %s311 = sand.u32 %s158, 1
        %s312 = scalar_lea.sflag [#allocation10], %s311
        %s313 = sand.u32 %s158, 1
        %s314 = smul.addr %s313, 8
        %s315 = scalar_lea.vmem [#allocation9], %s314
        %s316 = sadd.s32 %s32, %s33
        %s317 = sadd.s32 %s32, %s33
        %s318 = sadd.s32 %s32, %s33
        %p319 = scmp.eq.s32.totalorder %s33, 0
        // Predicated region
        $region45: #{tpu_custom_call.1} parent=31 // pred_check
          %p320 = pneg %p319
        $region46: #{tpu_custom_call.1} parent=31 // pred_check_branch
          %322 = sbr.rel (%p320) target = $region48
        $region47: #{tpu_custom_call.1} parent=31 // pred_region
          %323 = vst [vmem:[%s308] sm:$0xff] 0.0
          %324 = vst [vmem:[%s315] sm:$0xff] 0.0
        $region48: #{tpu_custom_call.1} parent=31 // pred_fallthru
          _
        %v325 = vld [vmem:[%s258] sm:$0xff]
        %v326 = vld [vmem:[%s267] sm:$0xff]
        %v327 = vld [vmem:[%s276] sm:$0xff]
        %v328 = vmul.f32 %v325, %v327
        %v329 = vmul.f32 %v328, %v326
        %v330 = vadd.f32 %v329, 0.0
        %v331 = vadd.f32 %v328, 0.0
        %v332 = vmul.f32 %v326, %v327
        %v333 = vadd.f32 %v331, %v332
        %v334 = vld [vmem:[%s308] sm:$0xff]
        %v335 = vadd.f32 %v334, %v330
        %336 = vst [vmem:[%s308] sm:$0xff] %v335
        %v337 = vld [vmem:[%s315] sm:$0xff]
        %v338 = vadd.f32 %v337, %v333
        %339 = vst [vmem:[%s315] sm:$0xff] %v338
        %s340 = sand.u32 %s132, 1
        %s341 = scalar_lea.sflag [#allocation4], %s340
        %s342 = sand.u32 %s132, 1
        %s343 = smul.addr %s342, 8
        %s344 = scalar_lea.vmem [#allocation8], %s343
        %s345 = sand.u32 %s158, 1
        %s346 = scalar_lea.sflag [#allocation10], %s345
        %s347 = sand.u32 %s158, 1
        %s348 = smul.addr %s347, 8
        %s349 = scalar_lea.vmem [#allocation9], %s348
        // Predicated region
        $region49: #{tpu_custom_call.1} parent=31 // pred_check
          %p350 = pneg %p142
        $region50: #{tpu_custom_call.1} parent=31 // pred_check_branch
          %352 = sbr.rel (%p350) target = $region52
        $region51: #{tpu_custom_call.1} parent=31 // pred_region
          %s354 = ssub.s32 128, 128
          %355 = vsyncadd %s341, %s354
          %s356 = smul.addr %s32, 128
          %s357 = scalar_lea.hbm %s3, %s356
          %s359 = sshll.u32 %s344, 4
          %s360 = int_to_ptr.vmem [resolvable:$true] %s359
          %362 = dma.vmem_to_hbm [thread:$0]  %s360, 128, %s357, %s341
        $region52: #{tpu_custom_call.1} parent=31 // pred_fallthru
          _
        // Predicated region
        $region53: #{tpu_custom_call.1} parent=31 // pred_check
          %p363 = pneg %p168
        $region54: #{tpu_custom_call.1} parent=31 // pred_check_branch
          %365 = sbr.rel (%p363) target = $region56
        $region55: #{tpu_custom_call.1} parent=31 // pred_region
          %s367 = ssub.s32 128, 128
          %368 = vsyncadd %s346, %s367
          %s369 = smul.addr %s32, 128
          %s370 = scalar_lea.hbm %s4, %s369
          %s372 = sshll.u32 %s349, 4
          %s373 = int_to_ptr.vmem [resolvable:$true] %s372
          %375 = dma.vmem_to_hbm [thread:$0]  %s373, 128, %s370, %s346
        $region56: #{tpu_custom_call.1} parent=31 // pred_fallthru
          _
      $region32: #{tpu_custom_call.1} parent=5 // pred_fallthru
        _
      %p376 = scmp.le.s32.totalorder 2, %s23
      // Predicated region
      $region57: #{tpu_custom_call.1} parent=5 // pred_check
        %p377 = pneg %p376
      $region58: #{tpu_custom_call.1} parent=5 // pred_check_branch
        %379 = sbr.rel (%p377) target = $region60
      $region59: #{tpu_custom_call.1} parent=5 // pred_region
        %s380 = ssub.s32 %s23, 2
        // Predicated region
        $region61: #{tpu_custom_call.1} parent=59 // pred_check
          %p381 = pneg %p148
        $region62: #{tpu_custom_call.1} parent=59 // pred_check_branch
          %383 = sbr.rel (%p381) target = $region64
        $region63: #{tpu_custom_call.1} parent=59 // pred_region
          %s384 = sand.u32 %s133, 1
          %s385 = scalar_lea.sflag [#allocation4], %s384
          %s386 = sand.u32 %s133, 1
          %s387 = smul.addr %s386, 8
          %s388 = scalar_lea.vmem [#allocation8], %s387
          %389 = dma.done %s385, 128
        $region64: #{tpu_custom_call.1} parent=59 // pred_fallthru
          _
        // Predicated region
        $region65: #{tpu_custom_call.1} parent=59 // pred_check
          %p390 = pneg %p174
        $region66: #{tpu_custom_call.1} parent=59 // pred_check_branch
          %392 = sbr.rel (%p390) target = $region68
        $region67: #{tpu_custom_call.1} parent=59 // pred_region
          %s393 = sand.u32 %s159, 1
          %s394 = scalar_lea.sflag [#allocation10], %s393
          %s395 = sand.u32 %s159, 1
          %s396 = smul.addr %s395, 8
          %s397 = scalar_lea.vmem [#allocation9], %s396
          %398 = dma.done %s394, 128
        $region68: #{tpu_custom_call.1} parent=59 // pred_fallthru
          _
      $region60: #{tpu_custom_call.1} parent=5 // pred_fallthru
        _
    $region6: #{tpu_custom_call.1} parent=1 // loop_footer
      %s27 = sadd.s32 1, %s23
    $region7: #{tpu_custom_call.1} parent=1 // loop_footer_branch
      %22 = sbr.rel target = $region3
    $region8: #{tpu_custom_call.1} parent=1 // loop_exit
      _
    %399 = vsyncpa [#allocation3], 1
    %s400 = scalar_lea.sflag [#allocation3], 1
    %401 = vsyncpa %s400, 1
    %402 = vsyncpa [#allocation6], 1
    %s403 = scalar_lea.sflag [#allocation6], 1
    %404 = vsyncpa %s403, 1
    %405 = vsyncpa [#allocation4], 1
    %s406 = scalar_lea.sflag [#allocation4], 1
    %407 = vsyncpa %s406, 1
    %408 = vsyncpa [#allocation10], 1
    %s409 = scalar_lea.sflag [#allocation10], 1
    %410 = vsyncpa %s409, 1

</llo_original>
